<compile_context>
chip_gen: v7x
topology: tpu7x:2x2x1
jax: 0.10.0
libtpu: 0.0.40
codegen_flags: <defaults>
</compile_context>

<pallas_src>
import jax
import jax.numpy as jnp
from jax.experimental import pallas as pl
from jax.experimental.pallas import tpu as pltpu

F_PAD = 128                    # lane-dense width used for state, h1, h2 and action dims
_PARAM_ROWS = 3 * F_PAD + 8    # three padded (128,128) weights + one (8,128) bias tile


def _qnetwork_kernel(x_ref, p_ref, out_ref):
    """Fused fc1 -> relu -> fc2 -> relu -> fc3 on one lane-dense (TM, 128) batch tile.

    p_ref is the packed, VMEM-resident parameter slab:
      rows [  0:128) : W1 zero-padded to (128, 128)
      rows [128:256) : W2 zero-padded to (128, 128)
      rows [256:384) : W3 zero-padded to (128, 128)
      rows [384:392) : bias tile; row 0 = b1, row 1 = b2, row 2 = b3 (each padded to 128 lanes)
    All slices below are static and 8-sublane / 128-lane aligned.
    """
    x = x_ref[...]                                   # (TM, 128)
    w1 = p_ref[0:128, :]
    w2 = p_ref[128:256, :]
    w3 = p_ref[256:384, :]
    b1 = p_ref[384:385, :]
    b2 = p_ref[385:386, :]
    b3 = p_ref[386:387, :]

    h1 = jnp.maximum(jnp.dot(x, w1, preferred_element_type=jnp.float32) + b1, 0.0)
    h2 = jnp.maximum(jnp.dot(h1, w2, preferred_element_type=jnp.float32) + b2, 0.0)
    q = jnp.dot(h2, w3, preferred_element_type=jnp.float32) + b3
    out_ref[...] = q.astype(out_ref.dtype)           # full-width, unmasked store


def _round_up(x, m):
    return (x + m - 1) // m * m


def _pack_params(w1, b1, w2, b2, w3, b3):
    """Pad weights to (128,128) / biases to (1,128) and stack into one (392,128) slab."""
    def pad_w(w):
        return jnp.zeros((F_PAD, F_PAD), jnp.float32).at[: w.shape[0], : w.shape[1]].set(w)

    def pad_b(b):
        b = b.reshape(1, -1)
        return jnp.zeros((1, F_PAD), jnp.float32).at[:, : b.shape[1]].set(b)

    bias_tile = jnp.zeros((8, F_PAD), jnp.float32)
    bias_tile = bias_tile.at[0:1].set(pad_b(b1)).at[1:2].set(pad_b(b2)).at[2:3].set(pad_b(b3))
    return jnp.concatenate([pad_w(w1), pad_w(w2), pad_w(w3), bias_tile], axis=0)


@jax.jit
def qnetwork_forward(state, w1, b1, w2, b2, w3, b3):
    """state: (B, state_size) float32 -> (B, action_size) float32 (matches the PyTorch module)."""
    batch, state_size = state.shape
    action_size = w3.shape[1]

    # Sublane-pad the batch; large row tiles so the (only) recurring HBM traffic — state rows —
    # is double-buffered by BlockSpec while the packed parameter slab stays VMEM-resident.
    tm = min(512, _round_up(batch, 8))
    b_pad = _round_up(batch, tm)

    x_pad = jnp.zeros((b_pad, F_PAD), jnp.float32).at[:batch, :state_size].set(state)
    params = _pack_params(w1, b1, w2, b2, w3, b3)

    flops = 2 * b_pad * (3 * F_PAD * F_PAD)
    bytes_accessed = 4 * (2 * b_pad * F_PAD + _PARAM_ROWS * F_PAD)

    out_pad = pl.pallas_call(
        _qnetwork_kernel,
        out_shape=jax.ShapeDtypeStruct((b_pad, F_PAD), jnp.float32),
        grid=(b_pad // tm,),
        in_specs=[
            pl.BlockSpec((tm, F_PAD), lambda i: (i, 0)),            # batch tiles stream
            pl.BlockSpec((_PARAM_ROWS, F_PAD), lambda i: (0, 0)),   # params resident
        ],
        out_specs=pl.BlockSpec((tm, F_PAD), lambda i: (i, 0)),
        compiler_params=pltpu.CompilerParams(
            dimension_semantics=("parallel",),                      # 2 TCs on v7x split the batch
        ),
        cost_estimate=pl.CostEstimate(
            flops=flops, transcendentals=0, bytes_accessed=bytes_accessed),
    )(x_pad, params)

    return out_pad[:batch, :action_size]


def init_qnetwork_params(key, state_size, action_size):
    """Mimics PyTorch nn.Linear default init (U[-1/sqrt(fan_in), +1/sqrt(fan_in)]).

    Weights stored as (in_features, out_features); biases as (1, out_features).
    """
    dims = [(state_size, 64), (64, 128), (128, action_size)]
    params = []
    for fan_in, fan_out in dims:
        key, kw, kb = jax.random.split(key, 3)
        bound = 1.0 / jnp.sqrt(float(fan_in))
        w = jax.random.uniform(kw, (fan_in, fan_out), jnp.float32, -bound, bound)
        b = jax.random.uniform(kb, (1, fan_out), jnp.float32, -bound, bound)
        params.extend([w, b])
    return tuple(params)


def _reference_forward(state, w1, b1, w2, b2, w3, b3):
    h1 = jnp.maximum(state @ w1 + b1, 0.0)
    h2 = jnp.maximum(h1 @ w2 + b2, 0.0)
    return h2 @ w3 + b3


if __name__ == "__main__":
    key = jax.random.PRNGKey(0)
    state_size, action_size = 16, 4
    params = init_qnetwork_params(key, state_size, action_size)

    # Small batch (single grid step, sublane-padded 4 -> 8).
    key, k1 = jax.random.split(key)
    state_small = jax.random.normal(k1, (4, state_size), jnp.float32)
    q_small = qnetwork_forward(state_small, *params)
    jax.block_until_ready(q_small)
    ref_small = _reference_forward(state_small, *params)
    assert q_small.shape == (4, action_size)
    assert jnp.allclose(q_small, ref_small, atol=1e-5, rtol=1e-5)

    # Larger batch exercising the tiled (multi-step, parallel) grid path.
    key, k2 = jax.random.split(key)
    state_big = jax.random.normal(k2, (520, state_size), jnp.float32)
    q_big = qnetwork_forward(state_big, *params)
    jax.block_until_ready(q_big)
    ref_big = _reference_forward(state_big, *params)
    assert q_big.shape == (520, action_size)
    assert jnp.allclose(q_big, ref_big, atol=1e-4, rtol=1e-4)

    print("KERNEL_OK")
</pallas_src>

<mosaic_0001>
module attributes {stable_mosaic.version = 11 : i64} {
  func.func @_qnetwork_kernel(%arg0: i32, %arg1: memref<8x128xf32, #tpu.memory_space<vmem>>, %arg2: memref<392x128xf32, #tpu.memory_space<vmem>>, %arg3: memref<8x128xf32, #tpu.memory_space<vmem>>) attributes {dimension_semantics = [#tpu.dimension_semantics<parallel>], iteration_bounds = array<i64: 1>, scalar_prefetch = 0 : i64, scratch_operands = 0 : i64, tpu.core_type = #tpu.core_type<tc>, window_params = [{transform_indices = @transform_0, window_bounds = array<i64: 8, 128>}, {pipeline_mode = #tpu.pipeline_mode<synchronous>, transform_indices = @transform_1, window_bounds = array<i64: 392, 128>}, {transform_indices = @transform_2, window_bounds = array<i64: 8, 128>}]} {
    %c0 = arith.constant 0 : index
    %c0_0 = arith.constant 0 : index
    %0 = vector.load %arg1[%c0, %c0_0] : memref<8x128xf32, #tpu.memory_space<vmem>>, vector<8x128xf32>
    %c0_1 = arith.constant 0 : index
    %c0_2 = arith.constant 0 : index
    %1 = vector.load %arg2[%c0_1, %c0_2] : memref<392x128xf32, #tpu.memory_space<vmem>>, vector<128x128xf32>
    %c128 = arith.constant 128 : index
    %c0_3 = arith.constant 0 : index
    %2 = vector.load %arg2[%c128, %c0_3] : memref<392x128xf32, #tpu.memory_space<vmem>>, vector<128x128xf32>
    %c256 = arith.constant 256 : index
    %c0_4 = arith.constant 0 : index
    %3 = vector.load %arg2[%c256, %c0_4] : memref<392x128xf32, #tpu.memory_space<vmem>>, vector<128x128xf32>
    %c384 = arith.constant 384 : index
    %c0_5 = arith.constant 0 : index
    %4 = vector.load %arg2[%c384, %c0_5] : memref<392x128xf32, #tpu.memory_space<vmem>>, vector<1x128xf32>
    %c385 = arith.constant 385 : index
    %c0_6 = arith.constant 0 : index
    %5 = vector.load %arg2[%c385, %c0_6] : memref<392x128xf32, #tpu.memory_space<vmem>>, vector<1x128xf32>
    %c386 = arith.constant 386 : index
    %c0_7 = arith.constant 0 : index
    %6 = vector.load %arg2[%c386, %c0_7] : memref<392x128xf32, #tpu.memory_space<vmem>>, vector<1x128xf32>
    %cst = arith.constant dense<0.000000e+00> : vector<8x128xf32>
    %7 = tpu.matmul %0, %1, %cst {dimension_numbers = #tpu.dot_dimension_numbers<[1], [0], [0], [1], [0, 0, 1, 1], [], []>} : vector<8x128xf32>, vector<128x128xf32>, vector<8x128xf32> -> vector<8x128xf32>
    %8 = vector.broadcast %4 : vector<1x128xf32> to vector<8x128xf32>
    %9 = arith.addf %7, %8 : vector<8x128xf32>
    %cst_8 = arith.constant 0.000000e+00 : f32
    %10 = vector.broadcast %cst_8 : f32 to vector<8x128xf32>
    %11 = arith.maximumf %9, %10 : vector<8x128xf32>
    %cst_9 = arith.constant dense<0.000000e+00> : vector<8x128xf32>
    %12 = tpu.matmul %11, %2, %cst_9 {dimension_numbers = #tpu.dot_dimension_numbers<[1], [0], [0], [1], [0, 0, 1, 1], [], []>} : vector<8x128xf32>, vector<128x128xf32>, vector<8x128xf32> -> vector<8x128xf32>
    %13 = vector.broadcast %5 : vector<1x128xf32> to vector<8x128xf32>
    %14 = arith.addf %12, %13 : vector<8x128xf32>
    %cst_10 = arith.constant 0.000000e+00 : f32
    %15 = vector.broadcast %cst_10 : f32 to vector<8x128xf32>
    %16 = arith.maximumf %14, %15 : vector<8x128xf32>
    %cst_11 = arith.constant dense<0.000000e+00> : vector<8x128xf32>
    %17 = tpu.matmul %16, %3, %cst_11 {dimension_numbers = #tpu.dot_dimension_numbers<[1], [0], [0], [1], [0, 0, 1, 1], [], []>} : vector<8x128xf32>, vector<128x128xf32>, vector<8x128xf32> -> vector<8x128xf32>
    %18 = vector.broadcast %6 : vector<1x128xf32> to vector<8x128xf32>
    %19 = arith.addf %17, %18 : vector<8x128xf32>
    %c0_12 = arith.constant 0 : index
    %c0_13 = arith.constant 0 : index
    %20 = vector.load %arg3[%c0_12, %c0_13] : memref<8x128xf32, #tpu.memory_space<vmem>>, vector<8x128xf32>
    tpu.vector_store %arg3[%c0_12, %c0_13], %19 {strides = array<i32>} : memref<8x128xf32, #tpu.memory_space<vmem>>, vector<8x128xf32>,
    return
  }
  func.func @transform_0(%arg0: i32) -> (i32, i32) {
    %c0_i32 = arith.constant 0 : i32
    %c0_i32_0 = arith.constant 0 : i32
    return %arg0, %c0_i32 : i32, i32
  }
  func.func @transform_1(%arg0: i32) -> (i32, i32) {
    %c0_i32 = arith.constant 0 : i32
    %c0_i32_0 = arith.constant 0 : i32
    %c0_i32_1 = arith.constant 0 : i32
    return %c0_i32, %c0_i32_0 : i32, i32
  }
  func.func @transform_2(%arg0: i32) -> (i32, i32) {
    %c0_i32 = arith.constant 0 : i32
    %c0_i32_0 = arith.constant 0 : i32
    return %arg0, %c0_i32 : i32, i32
  }
}

</mosaic_0001>

<llo_original>
// kernel: qnetwork_forward.1
$region0: #{qnetwork_forward.1}
  #allocation0 [shape = 'u32[]', space=smem, size = 0x4, offset = 0x4, fixed_abs, tag = 'smem constant byte address 0x4 - core index']
  #allocation1 [shape = 'u32[144,128]{1,0:T(1,128)}', space=vmem, size = 0x12000, scoped, tag = 'internal scratch']
  %s0 = inlined_call_operand.vmem [shape: f32[8,128], index: 0, kind: input, shape index: {}]
  %s1 = inlined_call_operand.vmem [shape: f32[392,128], index: 1, kind: input, shape index: {}]
  %s2 = inlined_call_operand.vmem [shape: f32[8,128], index: 2, kind: output, shape index: {}]
  %s3 = sld [smem:[#allocation0]]
  $region18: #{qnetwork_forward.1} parent=0
    _
  %s5 = ssub.s32 1, %s3
  %s6 = scalar_select 0, %s5, %s3
  // Predicated region
  $region2: #{qnetwork_forward.1} parent=0 // pred_check
    _
  $region3: #{qnetwork_forward.1} parent=0 // pred_check_branch
    %8 = sbr.rel (0) target = $region5
  $region4: #{qnetwork_forward.1} parent=0 // pred_region
    _
  $region5: #{qnetwork_forward.1} parent=0 // pred_fallthru
    _
  // Predicated region
  $region6: #{qnetwork_forward.1} parent=0 // pred_check
    _
  $region7: #{qnetwork_forward.1} parent=0 // pred_check_branch
    %10 = sbr.rel (0) target = $region9
  $region8: #{qnetwork_forward.1} parent=0 // pred_region
    _
  $region9: #{qnetwork_forward.1} parent=0 // pred_fallthru
    _
  %v11 = vld [vmem:[%s0] sm:$0xff]
  %v12 = vld [vmem:[%s1] sm:$0xff]
  %v13 = vld [vmem:[%s1 + $0x8] sm:$0xff]
  %v14 = vld [vmem:[%s1 + $0x10] sm:$0xff]
  %v15 = vld [vmem:[%s1 + $0x18] sm:$0xff]
  %v16 = vld [vmem:[%s1 + $0x20] sm:$0xff]
  %v17 = vld [vmem:[%s1 + $0x28] sm:$0xff]
  %v18 = vld [vmem:[%s1 + $0x30] sm:$0xff]
  %v19 = vld [vmem:[%s1 + $0x38] sm:$0xff]
  %v20 = vld [vmem:[%s1 + $0x40] sm:$0xff]
  %v21 = vld [vmem:[%s1 + $0x48] sm:$0xff]
  %v22 = vld [vmem:[%s1 + $0x50] sm:$0xff]
  %v23 = vld [vmem:[%s1 + $0x58] sm:$0xff]
  %v24 = vld [vmem:[%s1 + $0x60] sm:$0xff]
  %v25 = vld [vmem:[%s1 + $0x68] sm:$0xff]
  %v26 = vld [vmem:[%s1 + $0x70] sm:$0xff]
  %v27 = vld [vmem:[%s1 + $0x78] sm:$0xff]
  %v28 = vld [vmem:[%s1 + $0x80] sm:$0xff]
  %v29 = vld [vmem:[%s1 + $0x88] sm:$0xff]
  %v30 = vld [vmem:[%s1 + $0x90] sm:$0xff]
  %v31 = vld [vmem:[%s1 + $0x98] sm:$0xff]
  %v32 = vld [vmem:[%s1 + $0xa0] sm:$0xff]
  %v33 = vld [vmem:[%s1 + $0xa8] sm:$0xff]
  %v34 = vld [vmem:[%s1 + $0xb0] sm:$0xff]
  %v35 = vld [vmem:[%s1 + $0xb8] sm:$0xff]
  %v36 = vld [vmem:[%s1 + $0xc0] sm:$0xff]
  %v37 = vld [vmem:[%s1 + $0xc8] sm:$0xff]
  %v38 = vld [vmem:[%s1 + $0xd0] sm:$0xff]
  %v39 = vld [vmem:[%s1 + $0xd8] sm:$0xff]
  %v40 = vld [vmem:[%s1 + $0xe0] sm:$0xff]
  %v41 = vld [vmem:[%s1 + $0xe8] sm:$0xff]
  %v42 = vld [vmem:[%s1 + $0xf0] sm:$0xff]
  %v43 = vld [vmem:[%s1 + $0xf8] sm:$0xff]
  %v44 = vld [vmem:[%s1 + $0x100] sm:$0xff]
  %v45 = vld [vmem:[%s1 + $0x108] sm:$0xff]
  %v46 = vld [vmem:[%s1 + $0x110] sm:$0xff]
  %v47 = vld [vmem:[%s1 + $0x118] sm:$0xff]
  %v48 = vld [vmem:[%s1 + $0x120] sm:$0xff]
  %v49 = vld [vmem:[%s1 + $0x128] sm:$0xff]
  %v50 = vld [vmem:[%s1 + $0x130] sm:$0xff]
  %v51 = vld [vmem:[%s1 + $0x138] sm:$0xff]
  %v52 = vld [vmem:[%s1 + $0x140] sm:$0xff]
  %v53 = vld [vmem:[%s1 + $0x148] sm:$0xff]
  %v54 = vld [vmem:[%s1 + $0x150] sm:$0xff]
  %v55 = vld [vmem:[%s1 + $0x158] sm:$0xff]
  %v56 = vld [vmem:[%s1 + $0x160] sm:$0xff]
  %v57 = vld [vmem:[%s1 + $0x168] sm:$0xff]
  %v58 = vld [vmem:[%s1 + $0x170] sm:$0xff]
  %v59 = vld [vmem:[%s1 + $0x178] sm:$0xff]
  %v60 = vld [vmem:[%s1 + $0x180] sm:$0x1]
  %v61 = vld [vmem:[%s1 + $0x181] sm:$0x1]
  %v62 = vld [vmem:[%s1 + $0x182] sm:$0x1]
  %v63 = vlaneseq
  %v64 = vshrl.u32 %v63, 7
  %v65 = vsub.s32 0, %v64
  %v66 = vrot.slane %v60, %v65
  %67 = vmatprep.subr.mxu0 0.0
  %68 = vmatpush1.msra.mxu0 %v12
  %69 = vmatprep.subr.mxu0 0.0
  %70 = vmatpush1.msra.mxu0 %v13
  %71 = vmatprep.subr.mxu0 0.0
  %72 = vmatpush1.msra.mxu0 %v14
  %73 = vmatprep.subr.mxu0 0.0
  %74 = vmatpush1.msra.mxu0 %v15
  %75 = vmatprep.subr.mxu0 0.0
  %76 = vmatpush1.msra.mxu0 %v16
  %77 = vmatprep.subr.mxu0 0.0
  %78 = vmatpush1.msra.mxu0 %v17
  %79 = vmatprep.subr.mxu0 0.0
  %80 = vmatpush1.msra.mxu0 %v18
  %81 = vmatprep.subr.mxu0 0.0
  %82 = vmatpush1.msra.mxu0 %v19
  %83 = vmatprep.subr.mxu0 0.0
  %84 = vmatpush1.msra.mxu0 %v20
  %85 = vmatprep.subr.mxu0 0.0
  %86 = vmatpush1.msra.mxu0 %v21
  %87 = vmatprep.subr.mxu0 0.0
  %88 = vmatpush1.msra.mxu0 %v22
  %89 = vmatprep.subr.mxu0 0.0
  %90 = vmatpush1.msra.mxu0 %v23
  %91 = vmatprep.subr.mxu0 0.0
  %92 = vmatpush1.msra.mxu0 %v24
  %93 = vmatprep.subr.mxu0 0.0
  %94 = vmatpush1.msra.mxu0 %v25
  %95 = vmatprep.subr.mxu0 0.0
  %96 = vmatpush1.msra.mxu0 %v26
  %97 = vmatprep.subr.mxu0 0.0
  %98 = vmatpush1.msra.mxu0 %v27
  %99 = vmatprep.subr.mxu0 0.0
  %100 = vmatpush1.msra.mxu0 0.0
  %101 = vmatprep.subr.mxu0 0.0
  %102 = vmatpush1.msra.mxu0 0.0
  %103 = vmatprep.subr.mxu0 0.0
  %104 = vmatpush1.msra.mxu0 0.0
  %105 = vmatprep.subr.mxu0 0.0
  %106 = vmatpush1.msra.mxu0 0.0
  %107 = vmatprep.subr.mxu0 0.0
  %108 = vmatpush1.msra.mxu0 0.0
  %109 = vmatprep.subr.mxu0 0.0
  %110 = vmatpush1.msra.mxu0 0.0
  %111 = vmatprep.subr.mxu0 0.0
  %112 = vmatpush1.msra.mxu0 0.0
  %113 = vmatprep.subr.mxu0 0.0
  %114 = vmatpush1.msra.mxu0 0.0
  %115 = vmatprep.subr.mxu0 0.0
  %116 = vmatpush1.msra.mxu0 0.0
  %117 = vmatprep.subr.mxu0 0.0
  %118 = vmatpush1.msra.mxu0 0.0
  %119 = vmatprep.subr.mxu0 0.0
  %120 = vmatpush1.msra.mxu0 0.0
  %121 = vmatprep.subr.mxu0 0.0
  %122 = vmatpush1.msra.mxu0 0.0
  %123 = vmatprep.subr.mxu0 0.0
  %124 = vmatpush1.msra.mxu0 0.0
  %125 = vmatprep.subr.mxu0 0.0
  %126 = vmatpush1.msra.mxu0 0.0
  %127 = vmatprep.subr.mxu0 0.0
  %128 = vmatpush1.msra.mxu0 0.0
  %129 = vmatprep.subr.mxu0 0.0
  %130 = vmatpush1.msra.mxu0 0.0
  %131 = vmatprep.mubr.f32.mxu0 0.0
  %132 = vmatmul.mubr.f32.gmra.mrb[0].mxu0 %v11
  %v133 = vpop.f32.mrb[0].mxu0
  %v134 = vadd.f32 %v66, %v133
  %v135 = vpop.f32.mrb[0].mxu0
  %136 = vdwg.mxu0
  %v137 = vmax.f32 %v134, 0.0
  %v138 = vlaneseq
  %v139 = vshrl.u32 %v138, 7
  %v140 = vsub.s32 0, %v139
  %v141 = vrot.slane %v61, %v140
  %142 = vmatprep.subr.mxu0 0.0
  %143 = vmatpush1.msra.mxu0 %v28
  %144 = vmatprep.subr.mxu0 0.0
  %145 = vmatpush1.msra.mxu0 %v29
  %146 = vmatprep.subr.mxu0 0.0
  %147 = vmatpush1.msra.mxu0 %v30
  %148 = vmatprep.subr.mxu0 0.0
  %149 = vmatpush1.msra.mxu0 %v31
  %150 = vmatprep.subr.mxu0 0.0
  %151 = vmatpush1.msra.mxu0 %v32
  %152 = vmatprep.subr.mxu0 0.0
  %153 = vmatpush1.msra.mxu0 %v33
  %154 = vmatprep.subr.mxu0 0.0
  %155 = vmatpush1.msra.mxu0 %v34
  %156 = vmatprep.subr.mxu0 0.0
  %157 = vmatpush1.msra.mxu0 %v35
  %158 = vmatprep.subr.mxu0 0.0
  %159 = vmatpush1.msra.mxu0 %v36
  %160 = vmatprep.subr.mxu0 0.0
  %161 = vmatpush1.msra.mxu0 %v37
  %162 = vmatprep.subr.mxu0 0.0
  %163 = vmatpush1.msra.mxu0 %v38
  %164 = vmatprep.subr.mxu0 0.0
  %165 = vmatpush1.msra.mxu0 %v39
  %166 = vmatprep.subr.mxu0 0.0
  %167 = vmatpush1.msra.mxu0 %v40
  %168 = vmatprep.subr.mxu0 0.0
  %169 = vmatpush1.msra.mxu0 %v41
  %170 = vmatprep.subr.mxu0 0.0
  %171 = vmatpush1.msra.mxu0 %v42
  %172 = vmatprep.subr.mxu0 0.0
  %173 = vmatpush1.msra.mxu0 %v43
  %174 = vmatprep.subr.mxu0 0.0
  %175 = vmatpush1.msra.mxu0 0.0
  %176 = vmatprep.subr.mxu0 0.0
  %177 = vmatpush1.msra.mxu0 0.0
  %178 = vmatprep.subr.mxu0 0.0
  %179 = vmatpush1.msra.mxu0 0.0
  %180 = vmatprep.subr.mxu0 0.0
  %181 = vmatpush1.msra.mxu0 0.0
  %182 = vmatprep.subr.mxu0 0.0
  %183 = vmatpush1.msra.mxu0 0.0
  %184 = vmatprep.subr.mxu0 0.0
  %185 = vmatpush1.msra.mxu0 0.0
  %186 = vmatprep.subr.mxu0 0.0
  %187 = vmatpush1.msra.mxu0 0.0
  %188 = vmatprep.subr.mxu0 0.0
  %189 = vmatpush1.msra.mxu0 0.0
  %190 = vmatprep.subr.mxu0 0.0
  %191 = vmatpush1.msra.mxu0 0.0
  %192 = vmatprep.subr.mxu0 0.0
  %193 = vmatpush1.msra.mxu0 0.0
  %194 = vmatprep.subr.mxu0 0.0
  %195 = vmatpush1.msra.mxu0 0.0
  %196 = vmatprep.subr.mxu0 0.0
  %197 = vmatpush1.msra.mxu0 0.0
  %198 = vmatprep.subr.mxu0 0.0
  %199 = vmatpush1.msra.mxu0 0.0
  %200 = vmatprep.subr.mxu0 0.0
  %201 = vmatpush1.msra.mxu0 0.0
  %202 = vmatprep.subr.mxu0 0.0
  %203 = vmatpush1.msra.mxu0 0.0
  %204 = vmatprep.subr.mxu0 0.0
  %205 = vmatpush1.msra.mxu0 0.0
  %206 = vmatprep.mubr.f32.mxu0 0.0
  %207 = vmatmul.mubr.f32.gmra.mrb[0].mxu0 %v137
  %v208 = vpop.f32.mrb[0].mxu0
  %v209 = vadd.f32 %v141, %v208
  %v210 = vpop.f32.mrb[0].mxu0
  %211 = vdwg.mxu0
  %v212 = vmax.f32 %v209, 0.0
  %v213 = vlaneseq
  %v214 = vshrl.u32 %v213, 7
  %v215 = vsub.s32 0, %v214
  %v216 = vrot.slane %v62, %v215
  %217 = vmatprep.subr.mxu0 0.0
  %218 = vmatpush1.msra.mxu0 %v44
  %219 = vmatprep.subr.mxu0 0.0
  %220 = vmatpush1.msra.mxu0 %v45
  %221 = vmatprep.subr.mxu0 0.0
  %222 = vmatpush1.msra.mxu0 %v46
  %223 = vmatprep.subr.mxu0 0.0
  %224 = vmatpush1.msra.mxu0 %v47
  %225 = vmatprep.subr.mxu0 0.0
  %226 = vmatpush1.msra.mxu0 %v48
  %227 = vmatprep.subr.mxu0 0.0
  %228 = vmatpush1.msra.mxu0 %v49
  %229 = vmatprep.subr.mxu0 0.0
  %230 = vmatpush1.msra.mxu0 %v50
  %231 = vmatprep.subr.mxu0 0.0
  %232 = vmatpush1.msra.mxu0 %v51
  %233 = vmatprep.subr.mxu0 0.0
  %234 = vmatpush1.msra.mxu0 %v52
  %235 = vmatprep.subr.mxu0 0.0
  %236 = vmatpush1.msra.mxu0 %v53
  %237 = vmatprep.subr.mxu0 0.0
  %238 = vmatpush1.msra.mxu0 %v54
  %239 = vmatprep.subr.mxu0 0.0
  %240 = vmatpush1.msra.mxu0 %v55
  %241 = vmatprep.subr.mxu0 0.0
  %242 = vmatpush1.msra.mxu0 %v56
  %243 = vmatprep.subr.mxu0 0.0
  %244 = vmatpush1.msra.mxu0 %v57
  %245 = vmatprep.subr.mxu0 0.0
  %246 = vmatpush1.msra.mxu0 %v58
  %247 = vmatprep.subr.mxu0 0.0
  %248 = vmatpush1.msra.mxu0 %v59
  %249 = vmatprep.subr.mxu0 0.0
  %250 = vmatpush1.msra.mxu0 0.0
  %251 = vmatprep.subr.mxu0 0.0
  %252 = vmatpush1.msra.mxu0 0.0
  %253 = vmatprep.subr.mxu0 0.0
  %254 = vmatpush1.msra.mxu0 0.0
  %255 = vmatprep.subr.mxu0 0.0
  %256 = vmatpush1.msra.mxu0 0.0
  %257 = vmatprep.subr.mxu0 0.0
  %258 = vmatpush1.msra.mxu0 0.0
  %259 = vmatprep.subr.mxu0 0.0
  %260 = vmatpush1.msra.mxu0 0.0
  %261 = vmatprep.subr.mxu0 0.0
  %262 = vmatpush1.msra.mxu0 0.0
  %263 = vmatprep.subr.mxu0 0.0
  %264 = vmatpush1.msra.mxu0 0.0
  %265 = vmatprep.subr.mxu0 0.0
  %266 = vmatpush1.msra.mxu0 0.0
  %267 = vmatprep.subr.mxu0 0.0
  %268 = vmatpush1.msra.mxu0 0.0
  %269 = vmatprep.subr.mxu0 0.0
  %270 = vmatpush1.msra.mxu0 0.0
  %271 = vmatprep.subr.mxu0 0.0
  %272 = vmatpush1.msra.mxu0 0.0
  %273 = vmatprep.subr.mxu0 0.0
  %274 = vmatpush1.msra.mxu0 0.0
  %275 = vmatprep.subr.mxu0 0.0
  %276 = vmatpush1.msra.mxu0 0.0
  %277 = vmatprep.subr.mxu0 0.0
  %278 = vmatpush1.msra.mxu0 0.0
  %279 = vmatprep.subr.mxu0 0.0
  %280 = vmatpush1.msra.mxu0 0.0
  %281 = vmatprep.mubr.f32.mxu0 0.0
  %282 = vmatmul.mubr.f32.gmra.mrb[0].mxu0 %v212
  %v283 = vpop.f32.mrb[0].mxu0
  %v284 = vadd.f32 %v216, %v283
  %v285 = vpop.f32.mrb[0].mxu0
  %286 = vdwg.mxu0
  %287 = vst [vmem:[%s2] sm:$0xff] %v284
  // Predicated region
  $region10: #{qnetwork_forward.1} parent=0 // pred_check
    _
  $region11: #{qnetwork_forward.1} parent=0 // pred_check_branch
    %289 = sbr.rel (0) target = $region13
  $region12: #{qnetwork_forward.1} parent=0 // pred_region
    _
  $region13: #{qnetwork_forward.1} parent=0 // pred_fallthru
    _
  // Predicated region
  $region14: #{qnetwork_forward.1} parent=0 // pred_check
    _
  $region15: #{qnetwork_forward.1} parent=0 // pred_check_branch
    %291 = sbr.rel (0) target = $region17
  $region16: #{qnetwork_forward.1} parent=0 // pred_region
    _
  $region17: #{qnetwork_forward.1} parent=0 // pred_fallthru
    _

</llo_original>
